<compile_context>
chip_gen: v7x
topology: tpu7x:2x2x1
jax: 0.10.0
libtpu: 0.0.40
codegen_flags: <defaults>
</compile_context>

<pallas_src>
import jax
import jax.numpy as jnp
from jax.experimental import pallas as pl
from jax.experimental.pallas import tpu as pltpu

_LANE = 128         # f32 vreg lane width (last dim)
_SUBLANE = 8        # f32 sublane count (second-to-last dim)
_TILE_R_MAX = 1024  # row-tile: 1024 x 128 f32 = 512 KiB per feature plane


def _mlp_kernel(params_ref, x_ref, o_ref):
    """params_ref: (9,) f32 in SMEM = [w1.flat(4), b1(2), w2.flat(2), b2].
    x_ref: (2, tile_r, 128) VMEM -- feature planes, batch on (sublane, lane).
    o_ref: (tile_r, 128) VMEM    -- lane-dense output slab."""
    w00 = params_ref[0]
    w01 = params_ref[1]
    w10 = params_ref[2]
    w11 = params_ref[3]
    b0 = params_ref[4]
    b1 = params_ref[5]
    v0 = params_ref[6]
    v1 = params_ref[7]
    b2 = params_ref[8]

    x0 = x_ref[0]                                     # (tile_r, 128)
    x1 = x_ref[1]                                     # (tile_r, 128)
    h0 = jnp.maximum(x0 * w00 + x1 * w01 + b0, 0.0)   # relu(fc1 row 0)
    h1 = jnp.maximum(x0 * w10 + x1 * w11 + b1, 0.0)   # relu(fc1 row 1)
    o_ref[...] = h0 * v0 + h1 * v1 + b2               # fc2


def simple_dnn_forward(x, w1, b1, w2, b2, *, min_pallas_batch=0):
    """x: (B, 2). Returns (B, 1) f32, matching SimpleDNNModel.forward."""
    x = x.astype(jnp.float32)
    B = x.shape[0]

    # Tiny batches: fixed pallas_call overhead dwarfs ~50 FLOPs of work;
    # callers can set e.g. min_pallas_batch=1024 to fall back to plain jnp.
    if B < min_pallas_batch:
        h = jnp.maximum(x @ w1.T + b1, 0.0)
        return h @ w2.T + b2

    # Lane-dense layout: pad batch to rows * 128, rows a multiple of the
    # row-tile (which is itself a multiple of the 8-sublane requirement).
    rows = -(-B // _LANE)                      # ceil(B / 128)
    rows = -(-rows // _SUBLANE) * _SUBLANE     # multiple of 8
    tile_r = min(_TILE_R_MAX, rows)
    rows = -(-rows // tile_r) * tile_r         # multiple of tile_r
    b_pad = rows * _LANE

    x_pad = jnp.pad(x, ((0, b_pad - B), (0, 0)))     # (b_pad, 2), zero-padded
    x_planes = x_pad.T.reshape(2, rows, _LANE)       # (2, rows, 128)

    params = jnp.concatenate([
        w1.astype(jnp.float32).reshape(-1),          # 4: w00 w01 w10 w11
        b1.astype(jnp.float32).reshape(-1),          # 2: b0 b1
        w2.astype(jnp.float32).reshape(-1),          # 2: v0 v1
        b2.astype(jnp.float32).reshape(-1),          # 1: b2
    ])                                               # (9,)

    out = pl.pallas_call(
        _mlp_kernel,
        out_shape=jax.ShapeDtypeStruct((rows, _LANE), jnp.float32),
        grid=(rows // tile_r,),
        in_specs=[
            pl.BlockSpec(memory_space=pltpu.MemorySpace.SMEM),      # params
            pl.BlockSpec((2, tile_r, _LANE), lambda i: (0, i, 0)),  # x planes
        ],
        out_specs=pl.BlockSpec((tile_r, _LANE), lambda i: (i, 0)),
        compiler_params=pltpu.CompilerParams(
            dimension_semantics=("parallel",)),
    )(params, x_planes)

    # Undo the lane-dense packing: batch b lives at (b // 128, b % 128).
    return out.reshape(-1)[:B].reshape(B, 1)


if __name__ == "__main__":
    # Deterministic parameters exactly as set in SimpleDNNModel.__init__
    w1 = jnp.array([[1.1, 1.0], [1.0, 1.1]], dtype=jnp.float32)  # fc1.weight
    b1 = jnp.array([0.0, -1.0], dtype=jnp.float32)               # fc1.bias
    w2 = jnp.array([[1.1, -2.1]], dtype=jnp.float32)             # fc2.weight
    b2 = jnp.array(0.0, dtype=jnp.float32)                       # fc2.bias

    # Small deterministic input: batch=8, in_features=2
    key = jax.random.PRNGKey(0)
    x = jax.random.normal(key, (8, 2), dtype=jnp.float32)

    out = simple_dnn_forward(x, w1, b1, w2, b2)
    out = jax.block_until_ready(out)

    # Pure-JAX reference
    ref = jnp.maximum(x @ w1.T + b1, 0.0) @ w2.T + b2
    assert out.shape == (8, 1)
    assert jnp.allclose(out, ref, atol=1e-5, rtol=1e-5)

    print("KERNEL_OK")
</pallas_src>

<mosaic_0001>
module attributes {stable_mosaic.version = 11 : i64} {
  func.func @_mlp_kernel(%arg0: i32, %arg1: memref<9xf32, #tpu.memory_space<smem>>, %arg2: memref<2x8x128xf32, #tpu.memory_space<vmem>>, %arg3: memref<8x128xf32, #tpu.memory_space<vmem>>) attributes {dimension_semantics = [#tpu.dimension_semantics<parallel>], iteration_bounds = array<i64: 1>, scalar_prefetch = 0 : i64, scratch_operands = 0 : i64, tpu.core_type = #tpu.core_type<tc>, window_params = [{transform_indices = @transform_0, window_bounds = array<i64: 9>}, {transform_indices = @transform_1, window_bounds = array<i64: 2, 8, 128>}, {transform_indices = @transform_2, window_bounds = array<i64: 8, 128>}]} {
    %c0 = arith.constant 0 : index
    %0 = memref.load %arg1[%c0] : memref<9xf32, #tpu.memory_space<smem>>
    %c1 = arith.constant 1 : index
    %1 = memref.load %arg1[%c1] : memref<9xf32, #tpu.memory_space<smem>>
    %c2 = arith.constant 2 : index
    %2 = memref.load %arg1[%c2] : memref<9xf32, #tpu.memory_space<smem>>
    %c3 = arith.constant 3 : index
    %3 = memref.load %arg1[%c3] : memref<9xf32, #tpu.memory_space<smem>>
    %c4 = arith.constant 4 : index
    %4 = memref.load %arg1[%c4] : memref<9xf32, #tpu.memory_space<smem>>
    %c5 = arith.constant 5 : index
    %5 = memref.load %arg1[%c5] : memref<9xf32, #tpu.memory_space<smem>>
    %c6 = arith.constant 6 : index
    %6 = memref.load %arg1[%c6] : memref<9xf32, #tpu.memory_space<smem>>
    %c7 = arith.constant 7 : index
    %7 = memref.load %arg1[%c7] : memref<9xf32, #tpu.memory_space<smem>>
    %c8 = arith.constant 8 : index
    %8 = memref.load %arg1[%c8] : memref<9xf32, #tpu.memory_space<smem>>
    %c0_0 = arith.constant 0 : index
    %c0_1 = arith.constant 0 : index
    %c0_2 = arith.constant 0 : index
    %9 = vector.load %arg2[%c0_0, %c0_1, %c0_2] : memref<2x8x128xf32, #tpu.memory_space<vmem>>, vector<1x8x128xf32>
    %10 = vector.shape_cast %9 : vector<1x8x128xf32> to vector<8x128xf32>
    %c1_3 = arith.constant 1 : index
    %c0_4 = arith.constant 0 : index
    %c0_5 = arith.constant 0 : index
    %11 = vector.load %arg2[%c1_3, %c0_4, %c0_5] : memref<2x8x128xf32, #tpu.memory_space<vmem>>, vector<1x8x128xf32>
    %12 = vector.shape_cast %11 : vector<1x8x128xf32> to vector<8x128xf32>
    %13 = vector.broadcast %0 : f32 to vector<8x128xf32>
    %14 = arith.mulf %10, %13 : vector<8x128xf32>
    %15 = vector.broadcast %1 : f32 to vector<8x128xf32>
    %16 = arith.mulf %12, %15 : vector<8x128xf32>
    %17 = arith.addf %14, %16 : vector<8x128xf32>
    %18 = vector.broadcast %4 : f32 to vector<8x128xf32>
    %19 = arith.addf %17, %18 : vector<8x128xf32>
    %cst = arith.constant 0.000000e+00 : f32
    %20 = vector.broadcast %cst : f32 to vector<8x128xf32>
    %21 = arith.maximumf %19, %20 : vector<8x128xf32>
    %22 = vector.broadcast %2 : f32 to vector<8x128xf32>
    %23 = arith.mulf %10, %22 : vector<8x128xf32>
    %24 = vector.broadcast %3 : f32 to vector<8x128xf32>
    %25 = arith.mulf %12, %24 : vector<8x128xf32>
    %26 = arith.addf %23, %25 : vector<8x128xf32>
    %27 = vector.broadcast %5 : f32 to vector<8x128xf32>
    %28 = arith.addf %26, %27 : vector<8x128xf32>
    %cst_6 = arith.constant 0.000000e+00 : f32
    %29 = vector.broadcast %cst_6 : f32 to vector<8x128xf32>
    %30 = arith.maximumf %28, %29 : vector<8x128xf32>
    %31 = vector.broadcast %6 : f32 to vector<8x128xf32>
    %32 = arith.mulf %21, %31 : vector<8x128xf32>
    %33 = vector.broadcast %7 : f32 to vector<8x128xf32>
    %34 = arith.mulf %30, %33 : vector<8x128xf32>
    %35 = arith.addf %32, %34 : vector<8x128xf32>
    %36 = vector.broadcast %8 : f32 to vector<8x128xf32>
    %37 = arith.addf %35, %36 : vector<8x128xf32>
    %c0_7 = arith.constant 0 : index
    %c0_8 = arith.constant 0 : index
    %38 = vector.load %arg3[%c0_7, %c0_8] : memref<8x128xf32, #tpu.memory_space<vmem>>, vector<8x128xf32>
    tpu.vector_store %arg3[%c0_7, %c0_8], %37 {strides = array<i32>} : memref<8x128xf32, #tpu.memory_space<vmem>>, vector<8x128xf32>,
    return
  }
  func.func @transform_0(%arg0: i32) -> i32 {
    %c0_i32 = arith.constant 0 : i32
    %c0_i32_0 = arith.constant 0 : i32
    return %c0_i32 : i32
  }
  func.func @transform_1(%arg0: i32) -> (i32, i32, i32) {
    %c0_i32 = arith.constant 0 : i32
    %c0_i32_0 = arith.constant 0 : i32
    %c0_i32_1 = arith.constant 0 : i32
    return %c0_i32, %arg0, %c0_i32_0 : i32, i32, i32
  }
  func.func @transform_2(%arg0: i32) -> (i32, i32) {
    %c0_i32 = arith.constant 0 : i32
    %c0_i32_0 = arith.constant 0 : i32
    return %arg0, %c0_i32 : i32, i32
  }
}

</mosaic_0001>

<llo_original>
// kernel: tpu_custom_call.1
$region0: #{tpu_custom_call.1}
  #allocation0 [shape = 'u32[]', space=smem, size = 0x4, offset = 0x4, fixed_abs, tag = 'smem constant byte address 0x4 - core index']
  #allocation1 [shape = 'u32[144,128]{1,0:T(1,128)}', space=vmem, size = 0x12000, scoped, tag = 'internal scratch']
  %s0 = inlined_call_operand.hbm [shape: f32[9], index: 0, kind: input, shape index: {}]
  %s1 = inlined_call_operand.hbm [shape: f32[2,8,128], index: 1, kind: input, shape index: {}]
  %s2 = inlined_call_operand.hbm [shape: f32[8,128], index: 2, kind: output, shape index: {}]
  %s3 = sld [smem:[#allocation0]]
  $region26: #{tpu_custom_call.1} parent=0
    _
  %s5 = ssub.s32 1, %s3
  %s6 = scalar_select 0, %s5, %s3
  $region1: #{tpu_custom_call.1} parent=0
    #allocation2 [shape = 'u8[512]{0}', space=smem, size = 0x200, scoped, tag = 'input window, operand 0, single buffered']
    #allocation3 [shape = 's32[1]{0}', space=sflag, size = 0x4, scoped, tag = 'scoped memory for tpu_custom_call.1']
    #allocation4 [shape = 's32[1]{0}', space=sflag, size = 0x4, scoped, tag = 'scoped memory for tpu_custom_call.1']
    #allocation5 [shape = 's32[1]{0}', space=sflag, size = 0x4, scoped, tag = 'scoped memory for tpu_custom_call.1']
    #allocation6 [shape = 'u8[8192]{0}', space=vmem, size = 0x2000, scoped, tag = 'input window, operand 1, single buffered']
    #allocation7 [shape = 'u8[4096]{0}', space=vmem, size = 0x1000, scoped, tag = 'output window, operand 0, single buffered']
    %7 = vsyncpa [#allocation5], 0
    %8 = vsyncpa [#allocation3], 0
    %9 = vsyncpa [#allocation4], 0
    // Predicated region
    $region2: #{tpu_custom_call.1} parent=1 // pred_check
      _
    $region3: #{tpu_custom_call.1} parent=1 // pred_check_branch
      %11 = sbr.rel (0) target = $region5
    $region4: #{tpu_custom_call.1} parent=1 // pred_region
      %s13 = ssub.s32 16, 16
      %14 = vsyncadd [#allocation5], %s13
      %17 = dma.hbm_to_smem %s0, 16, [#allocation2], [#allocation5]
    $region5: #{tpu_custom_call.1} parent=1 // pred_fallthru
      _
    // Predicated region
    $region6: #{tpu_custom_call.1} parent=1 // pred_check
      _
    $region7: #{tpu_custom_call.1} parent=1 // pred_check_branch
      %19 = sbr.rel (0) target = $region9
    $region8: #{tpu_custom_call.1} parent=1 // pred_region
      %s21 = ssub.s32 256, 256
      %22 = vsyncadd [#allocation3], %s21
      %s23 = sshll.u32 [#allocation6], 4
      %s24 = int_to_ptr.vmem [resolvable:$true] %s23
      %29 = dma.hbm_to_vmem [thread:$0]  %s1, 256, %s24, [#allocation3], 128, 128, 8
    $region9: #{tpu_custom_call.1} parent=1 // pred_fallthru
      _
    // Predicated region
    $region10: #{tpu_custom_call.1} parent=1 // pred_check
      _
    $region11: #{tpu_custom_call.1} parent=1 // pred_check_branch
      %31 = sbr.rel (0) target = $region13
    $region12: #{tpu_custom_call.1} parent=1 // pred_region
      %32 = dma.done [#allocation5], 16
    $region13: #{tpu_custom_call.1} parent=1 // pred_fallthru
      _
    // Predicated region
    $region14: #{tpu_custom_call.1} parent=1 // pred_check
      _
    $region15: #{tpu_custom_call.1} parent=1 // pred_check_branch
      %34 = sbr.rel (0) target = $region17
    $region16: #{tpu_custom_call.1} parent=1 // pred_region
      %35 = dma.done [#allocation3], 256
    $region17: #{tpu_custom_call.1} parent=1 // pred_fallthru
      _
    %36 = sfence
    %s37 = sld [smem:[#allocation2]]
    %s38 = sld [smem:[#allocation2 + $0x1]]
    %s39 = sld [smem:[#allocation2 + $0x2]]
    %s40 = sld [smem:[#allocation2 + $0x3]]
    %s41 = sld [smem:[#allocation2 + $0x4]]
    %s42 = sld [smem:[#allocation2 + $0x5]]
    %s43 = sld [smem:[#allocation2 + $0x6]]
    %s44 = sld [smem:[#allocation2 + $0x7]]
    %s45 = sld [smem:[#allocation2 + $0x8]]
    %v46 = vld [vmem:[#allocation6] sm:$0xff]
    %s47 = scalar_lea.vmem [#allocation6], 8
    %v48 = vld [vmem:[%s47] sm:$0xff]
    %v49 = vstv %s37
    %v50 = vmul.f32 %v46, %v49
    %v51 = vstv %s38
    %v52 = vmul.f32 %v48, %v51
    %v53 = vadd.f32 %v50, %v52
    %v54 = vstv %s41
    %v55 = vadd.f32 %v53, %v54
    %v56 = vmax.f32 %v55, 0.0
    %v57 = vstv %s39
    %v58 = vmul.f32 %v46, %v57
    %v59 = vstv %s40
    %v60 = vmul.f32 %v48, %v59
    %v61 = vadd.f32 %v58, %v60
    %v62 = vstv %s42
    %v63 = vadd.f32 %v61, %v62
    %v64 = vmax.f32 %v63, 0.0
    %v65 = vstv %s43
    %v66 = vmul.f32 %v56, %v65
    %v67 = vstv %s44
    %v68 = vmul.f32 %v64, %v67
    %v69 = vadd.f32 %v66, %v68
    %v70 = vstv %s45
    %v71 = vadd.f32 %v69, %v70
    %72 = vst [vmem:[#allocation7] sm:$0xff] %v71
    // Predicated region
    $region18: #{tpu_custom_call.1} parent=1 // pred_check
      _
    $region19: #{tpu_custom_call.1} parent=1 // pred_check_branch
      %74 = sbr.rel (0) target = $region21
    $region20: #{tpu_custom_call.1} parent=1 // pred_region
      %s76 = ssub.s32 128, 128
      %77 = vsyncadd [#allocation4], %s76
      %s79 = sshll.u32 [#allocation7], 4
      %s80 = int_to_ptr.vmem [resolvable:$true] %s79
      %82 = dma.vmem_to_hbm [thread:$0]  %s80, 128, %s2, [#allocation4]
    $region21: #{tpu_custom_call.1} parent=1 // pred_fallthru
      _
    // Predicated region
    $region22: #{tpu_custom_call.1} parent=1 // pred_check
      _
    $region23: #{tpu_custom_call.1} parent=1 // pred_check_branch
      %84 = sbr.rel (0) target = $region25
    $region24: #{tpu_custom_call.1} parent=1 // pred_region
      %85 = dma.done [#allocation4], 128
    $region25: #{tpu_custom_call.1} parent=1 // pred_fallthru
      _
    %86 = vsyncpa [#allocation3], 1
    %87 = vsyncpa [#allocation4], 1
    %88 = vsyncpa [#allocation5], 1

</llo_original>
